<compile_context>
chip_gen: v7x
topology: tpu7x:2x2x1
jax: 0.10.0
libtpu: 0.0.40
codegen_flags: <defaults>
</compile_context>

<pallas_src>
import functools

import jax
import jax.numpy as jnp
from jax.experimental import pallas as pl
from jax.experimental.pallas import tpu as pltpu


def _round_up(x, m):
    return ((x + m - 1) // m) * m


def _sublane(dtype):
    # Minimum second-to-last-dim multiple for packed dtypes (f32:8, bf16:16, int8:32).
    return max(8, 32 // jnp.dtype(dtype).itemsize)


def _vmem_capacity_bytes():
    try:
        return int(pltpu.get_tpu_info().vmem_capacity_bytes)
    except Exception:
        return 64 * 1024 * 1024   # conservative (v7x-sized) fallback


def _pick_config(B, D, zi_dt, zj_dt, lbl_dt, row_tile, col_tile,
                 zj_resident_bytes, vmem_budget):
    zi_b = jnp.dtype(zi_dt).itemsize
    zj_b = jnp.dtype(zj_dt).itemsize
    lb_b = jnp.dtype(lbl_dt).itemsize
    sub_m = max(_sublane(zi_dt), _sublane(lbl_dt))

    # ---- row tile (tm) ----
    if row_tile is None:
        tm = 256
        # keep >= 2 row tiles whenever the batch allows (v7x megacore split)
        tm = min(tm, _round_up((B + 1) // 2, sub_m))
    else:
        tm = _round_up(row_tile, sub_m)
    tm = min(tm, _round_up(B, sub_m))
    tm = max(tm, sub_m)
    # shrink tm if the f32 accumulator + resident z_i tile alone blow the
    # budget (very large D)
    while tm > sub_m and tm * D * (4 + 2 * zi_b) > vmem_budget // 2:
        tm = max(sub_m, _round_up(tm // 2, sub_m))

    # ---- reduction (column) tile (tk) ----
    tk = 2048 if col_tile is None else _round_up(col_tile, 128)
    tk = min(tk, _round_up(B, 128))
    tk = max(tk, 128)

    def footprint(tm_, tk_, resident_):
        bp_cols = _round_up(B, tk_)
        n_col = bp_cols // tk_
        n_buf = 3 if n_col >= 3 else 2
        lbl = n_buf * tm_ * tk_ * lb_b
        zi = 2 * tm_ * D * zi_b
        zj = 2 * bp_cols * D * zj_b if resident_ else n_buf * tk_ * D * zj_b
        acc = tm_ * D * 4
        out = 2 * tm_ * 128 * 4
        return lbl + zi + zj + acc + out

    resident = _round_up(B, tk) * D * zj_b <= zj_resident_bytes

    # shrink until the buffered working set fits the VMEM budget
    while footprint(tm, tk, resident) > vmem_budget:
        if resident:
            resident = False
        elif tk > 128:
            tk = max(128, _round_up(tk // 2, 128))
        elif tm > sub_m:
            tm = max(sub_m, _round_up(tm // 2, sub_m))
        else:
            break

    return tm, tk, resident, footprint(tm, tk, resident)


def _pos_partial_kernel(zi_ref, zj_ref, lbl_ref, out_ref, p_acc,
                        *, col_tile, zj_resident, compute_dtype):
    # Grid position reads stay at the top level of the kernel body
    # (never inside pl.when branches).
    k = pl.program_id(1)
    last_k = pl.num_programs(1) - 1

    @pl.when(k == 0)
    def _init():
        p_acc[...] = jnp.zeros_like(p_acc)

    if zj_resident:
        zj = zj_ref[pl.ds(k * col_tile, col_tile), :]   # slice of resident z_j
    else:
        zj = zj_ref[...]                                # streamed tile
    zj = zj.astype(compute_dtype)
    lbl = lbl_ref[...].astype(compute_dtype)

    # labels_tile @ z_j_tile on the MXU, f32 accumulation (contracting-dim
    # form: no materialized transpose).
    p_acc[...] += jax.lax.dot_general(
        lbl, zj, (((1,), (0,)), ((), ())),
        preferred_element_type=jnp.float32)

    @pl.when(k == last_k)
    def _finalize():
        zi = zi_ref[...].astype(jnp.float32)                    # [tm, D]
        pos = jnp.sum(zi * p_acc[...], axis=1, keepdims=True)   # [tm, 1]
        # Broadcast across 128 lanes: full unmasked vector store.
        out_ref[...] = jnp.broadcast_to(pos, out_ref.shape).astype(out_ref.dtype)


def instance_loss_with_label(z_i, z_j, labels_matrix, temperature=1.0, *,
                             row_tile=None, col_tile=None,
                             zj_resident_bytes=8 * 1024 * 1024,
                             vmem_budget_bytes=None):
    """Pallas-backed equivalent of InstanceLossWithLabel.forward."""
    B, D = z_i.shape
    assert z_j.shape == (B, D)
    assert labels_matrix.shape == (B, B)

    cap = _vmem_capacity_bytes()
    if vmem_budget_bytes is None:
        # v7x: 64 MiB physical per TC -> ~32 MiB budget; v5e/v6e: 128 MiB -> 56 MiB.
        vmem_budget_bytes = min(cap // 2, 56 * 1024 * 1024)

    tm, tk, zj_resident, footprint = _pick_config(
        B, D, z_i.dtype, z_j.dtype, labels_matrix.dtype,
        row_tile, col_tile, zj_resident_bytes, vmem_budget_bytes)

    bp_rows = _round_up(B, tm)
    bp_cols = _round_up(B, tk)
    n_row = bp_rows // tm
    n_col = bp_cols // tk

    # Zero padding: padded label columns / z_j rows contribute 0 to
    # labels @ z_j; padded z_i rows produce pos == 0 and are sliced off below.
    zi_p = z_i if bp_rows == B else jnp.pad(z_i, ((0, bp_rows - B), (0, 0)))
    zj_p = z_j if bp_cols == B else jnp.pad(z_j, ((0, bp_cols - B), (0, 0)))
    lbl_p = labels_matrix
    if bp_rows != B or bp_cols != B:
        lbl_p = jnp.pad(labels_matrix, ((0, bp_rows - B), (0, bp_cols - B)))

    # Labels (and streamed z_j) are pure streaming reads: triple-buffer when
    # the reduction axis is long enough to benefit.
    if n_col >= 3:
        lbl_spec = pl.BlockSpec((tm, tk), lambda i, k: (i, k),
                                pipeline_mode=pl.Buffered(3))
    else:
        lbl_spec = pl.BlockSpec((tm, tk), lambda i, k: (i, k))

    if zj_resident:
        # Single resident block: index_map constant -> DMA'd once, never
        # re-streamed across row tiles.
        zj_spec = pl.BlockSpec((bp_cols, D), lambda i, k: (0, 0))
    elif n_col >= 3:
        zj_spec = pl.BlockSpec((tk, D), lambda i, k: (k, 0),
                               pipeline_mode=pl.Buffered(3))
    else:
        zj_spec = pl.BlockSpec((tk, D), lambda i, k: (k, 0))

    # bf16 MXU path only when both streamed operands are already low-precision;
    # otherwise compute in f32 (matches the f32 reference).
    low_bits = (jnp.dtype(z_j.dtype) == jnp.dtype(jnp.bfloat16)
                and jnp.dtype(labels_matrix.dtype).itemsize <= 2)
    compute_dtype = jnp.bfloat16 if low_bits else jnp.float32

    kernel = functools.partial(_pos_partial_kernel, col_tile=tk,
                               zj_resident=zj_resident,
                               compute_dtype=compute_dtype)

    vmem_limit = int(min(max(32 * 1024 * 1024,
                             footprint * 3 // 2 + 4 * 1024 * 1024),
                         cap * 3 // 4))

    partials = pl.pallas_call(
        kernel,
        out_shape=jax.ShapeDtypeStruct((bp_rows, 128), jnp.float32),
        grid=(n_row, n_col),
        in_specs=[
            pl.BlockSpec((tm, D), lambda i, k: (i, 0)),   # z_i: resident per row tile
            zj_spec,                                       # z_j: resident or streamed
            lbl_spec,                                      # labels: streamed over k
        ],
        out_specs=pl.BlockSpec((tm, 128), lambda i, k: (i, 0)),
        scratch_shapes=[pltpu.VMEM((tm, D), jnp.float32)],  # running labels @ z_j
        compiler_params=pltpu.CompilerParams(
            dimension_semantics=("parallel", "arbitrary"),
            vmem_limit_bytes=vmem_limit,
        ),
    )(zi_p, zj_p, lbl_p)

    pos = partials[:B, 0] / temperature
    # neg hoisted out of the kernel (was n_row-fold redundant in-kernel):
    # one tiny XLA reduction over [B, D].
    colsum = jnp.sum(z_j.astype(jnp.float32), axis=0)
    neg = jnp.dot(z_i.astype(jnp.float32), colsum) / temperature
    return jnp.sum(pos / neg) / B


def _reference(z_i, z_j, labels_matrix, temperature=1.0):
    B = z_i.shape[0]
    sim = jnp.dot(z_i, z_j.T, precision=jax.lax.Precision.HIGHEST) / temperature
    pos = jnp.sum(sim * labels_matrix, axis=1)
    neg = jnp.sum(sim, axis=1)
    return jnp.sum(pos / neg) / B


if __name__ == "__main__":
    # Case 1: small shapes consistent with the module (batch=8, dim=32),
    # resident-z_j single-step path.
    k1, k2, k3 = jax.random.split(jax.random.PRNGKey(0), 3)
    B, D = 8, 32
    # Positive-valued embeddings keep the row-sum denominator away from 0.
    z_i = jax.random.uniform(k1, (B, D), jnp.float32, 0.1, 1.0)
    z_j = jax.random.uniform(k2, (B, D), jnp.float32, 0.1, 1.0)
    labels = jax.random.bernoulli(k3, 0.5, (B, B)).astype(jnp.float32)
    temperature = 0.5

    loss = jax.block_until_ready(
        instance_loss_with_label(z_i, z_j, labels, temperature))
    ref = _reference(z_i, z_j, labels, temperature)
    assert jnp.allclose(loss, ref, rtol=1e-5, atol=1e-5), (loss, ref)

    # Case 2: tiled grid with row/column padding and a *streamed* z_j
    # (residency disabled) with triple-buffered label/z_j tiles.
    k4, k5, k6 = jax.random.split(jax.random.PRNGKey(1), 3)
    B2, D2 = 300, 64
    z_i2 = jax.random.uniform(k4, (B2, D2), jnp.float32, 0.1, 1.0)
    z_j2 = jax.random.uniform(k5, (B2, D2), jnp.float32, 0.1, 1.0)
    labels2 = jax.random.bernoulli(k6, 0.5, (B2, B2)).astype(jnp.float32)
    loss2 = jax.block_until_ready(
        instance_loss_with_label(z_i2, z_j2, labels2, 1.0,
                                 row_tile=128, col_tile=128,
                                 zj_resident_bytes=0))
    ref2 = _reference(z_i2, z_j2, labels2, 1.0)
    assert jnp.allclose(loss2, ref2, rtol=1e-4, atol=1e-4), (loss2, ref2)

    # Case 3: resident z_j sliced in-kernel over multiple reduction steps,
    # two "parallel" row tiles, padded batch.
    k7, k8, k9 = jax.random.split(jax.random.PRNGKey(2), 3)
    B3, D3 = 260, 32
    z_i3 = jax.random.uniform(k7, (B3, D3), jnp.float32, 0.1, 1.0)
    z_j3 = jax.random.uniform(k8, (B3, D3), jnp.float32, 0.1, 1.0)
    labels3 = jax.random.bernoulli(k9, 0.5, (B3, B3)).astype(jnp.float32)
    loss3 = jax.block_until_ready(
        instance_loss_with_label(z_i3, z_j3, labels3, 2.0, col_tile=128))
    ref3 = _reference(z_i3, z_j3, labels3, 2.0)
    assert jnp.allclose(loss3, ref3, rtol=1e-4, atol=1e-4), (loss3, ref3)

    print("KERNEL_OK")
</pallas_src>

<mosaic_0001>
module attributes {stable_mosaic.version = 11 : i64} {
  func.func @_pos_partial_kernel(%arg0: i32, %arg1: i32, %arg2: memref<8x32xf32, #tpu.memory_space<vmem>>, %arg3: memref<128x32xf32, #tpu.memory_space<vmem>>, %arg4: memref<8x128xf32, #tpu.memory_space<vmem>>, %arg5: memref<8x128xf32, #tpu.memory_space<vmem>>, %arg6: memref<8x32xf32, #tpu.memory_space<vmem>>) attributes {dimension_semantics = [#tpu.dimension_semantics<parallel>, #tpu.dimension_semantics<arbitrary>], iteration_bounds = array<i64: 1, 1>, scalar_prefetch = 0 : i64, scratch_operands = 1 : i64, tpu.core_type = #tpu.core_type<tc>, window_params = [{transform_indices = @transform_0, window_bounds = array<i64: 8, 32>}, {pipeline_mode = #tpu.pipeline_mode<synchronous>, transform_indices = @transform_1, window_bounds = array<i64: 128, 32>}, {transform_indices = @transform_2, window_bounds = array<i64: 8, 128>}, {transform_indices = @transform_3, window_bounds = array<i64: 8, 128>}]} {
    %c0_i32 = arith.constant 0 : i32
    %0 = arith.cmpi eq, %arg1, %c0_i32 : i32
    %1 = arith.extui %0 : i1 to i32
    %c0_i32_0 = arith.constant 0 : i32
    %2 = arith.cmpi ne, %1, %c0_i32_0 : i32
    scf.if %2 {
      %cst_9 = arith.constant 0.000000e+00 : f32
      %14 = vector.broadcast %cst_9 : f32 to vector<8x32xf32>
      %c0_10 = arith.constant 0 : index
      %c0_11 = arith.constant 0 : index
      %15 = vector.load %arg6[%c0_10, %c0_11] : memref<8x32xf32, #tpu.memory_space<vmem>>, vector<8x32xf32>
      tpu.vector_store %arg6[%c0_10, %c0_11], %14 {strides = array<i32>} : memref<8x32xf32, #tpu.memory_space<vmem>>, vector<8x32xf32>,
    } else {
    }
    %c128_i32 = arith.constant 128 : i32
    %3 = arith.muli %arg1, %c128_i32 : i32
    %4 = arith.index_cast %3 : i32 to index
    %c0 = arith.constant 0 : index
    %5 = vector.load %arg3[%4, %c0] : memref<128x32xf32, #tpu.memory_space<vmem>>, vector<128x32xf32>
    %c0_1 = arith.constant 0 : index
    %c0_2 = arith.constant 0 : index
    %6 = vector.load %arg4[%c0_1, %c0_2] : memref<8x128xf32, #tpu.memory_space<vmem>>, vector<8x128xf32>
    %c0_3 = arith.constant 0 : index
    %c0_4 = arith.constant 0 : index
    %7 = vector.load %arg6[%c0_3, %c0_4] : memref<8x32xf32, #tpu.memory_space<vmem>>, vector<8x32xf32>
    %cst = arith.constant dense<0.000000e+00> : vector<8x32xf32>
    %8 = tpu.matmul %6, %5, %cst {dimension_numbers = #tpu.dot_dimension_numbers<[1], [0], [0], [1], [0, 0, 1, 1], [], []>} : vector<8x128xf32>, vector<128x32xf32>, vector<8x32xf32> -> vector<8x32xf32>
    %9 = arith.addf %7, %8 : vector<8x32xf32>
    %c0_5 = arith.constant 0 : index
    %c0_6 = arith.constant 0 : index
    %10 = vector.load %arg6[%c0_5, %c0_6] : memref<8x32xf32, #tpu.memory_space<vmem>>, vector<8x32xf32>
    tpu.vector_store %arg6[%c0_5, %c0_6], %9 {strides = array<i32>} : memref<8x32xf32, #tpu.memory_space<vmem>>, vector<8x32xf32>,
    %c0_i32_7 = arith.constant 0 : i32
    %11 = arith.cmpi eq, %arg1, %c0_i32_7 : i32
    %12 = arith.extui %11 : i1 to i32
    %c0_i32_8 = arith.constant 0 : i32
    %13 = arith.cmpi ne, %12, %c0_i32_8 : i32
    scf.if %13 {
      %c0_9 = arith.constant 0 : index
      %c0_10 = arith.constant 0 : index
      %14 = vector.load %arg2[%c0_9, %c0_10] : memref<8x32xf32, #tpu.memory_space<vmem>>, vector<8x32xf32>
      %c0_11 = arith.constant 0 : index
      %c0_12 = arith.constant 0 : index
      %15 = vector.load %arg6[%c0_11, %c0_12] : memref<8x32xf32, #tpu.memory_space<vmem>>, vector<8x32xf32>
      %16 = arith.mulf %14, %15 : vector<8x32xf32>
      %cst_13 = arith.constant dense<0.000000e+00> : vector<8xf32>
      %17 = vector.multi_reduction <add>, %16, %cst_13 [1] : vector<8x32xf32> to vector<8xf32>
      %18 = vector.shape_cast %17 : vector<8xf32> to vector<8x1xf32>
      %19 = vector.shape_cast %18 : vector<8x1xf32> to vector<8x1xf32>
      %20 = vector.broadcast %19 : vector<8x1xf32> to vector<8x128xf32>
      %c0_14 = arith.constant 0 : index
      %c0_15 = arith.constant 0 : index
      %21 = vector.load %arg5[%c0_14, %c0_15] : memref<8x128xf32, #tpu.memory_space<vmem>>, vector<8x128xf32>
      tpu.vector_store %arg5[%c0_14, %c0_15], %20 {strides = array<i32>} : memref<8x128xf32, #tpu.memory_space<vmem>>, vector<8x128xf32>,
    } else {
    }
    return
  }
  func.func @transform_0(%arg0: i32, %arg1: i32) -> (i32, i32) {
    %c0_i32 = arith.constant 0 : i32
    %c0_i32_0 = arith.constant 0 : i32
    return %arg0, %c0_i32 : i32, i32
  }
  func.func @transform_1(%arg0: i32, %arg1: i32) -> (i32, i32) {
    %c0_i32 = arith.constant 0 : i32
    %c0_i32_0 = arith.constant 0 : i32
    %c0_i32_1 = arith.constant 0 : i32
    return %c0_i32, %c0_i32_0 : i32, i32
  }
  func.func @transform_2(%arg0: i32, %arg1: i32) -> (i32, i32) {
    %c0_i32 = arith.constant 0 : i32
    return %arg0, %arg1 : i32, i32
  }
  func.func @transform_3(%arg0: i32, %arg1: i32) -> (i32, i32) {
    %c0_i32 = arith.constant 0 : i32
    %c0_i32_0 = arith.constant 0 : i32
    return %arg0, %c0_i32 : i32, i32
  }
}

</mosaic_0001>

<llo_original>
// kernel: tpu_custom_call.1
$region0: #{tpu_custom_call.1}
  #allocation0 [shape = 'u32[]', space=smem, size = 0x4, offset = 0x4, fixed_abs, tag = 'smem constant byte address 0x4 - core index']
  #allocation1 [shape = 'u32[144,128]{1,0:T(1,128)}', space=vmem, size = 0x12000, scoped, tag = 'internal scratch']
  #allocation2 [shape = 'f32[8,32]{1,0:T(8,128)}', space=vmem, size = 0x1000, scoped, tag = 'scratch operand']
  %s0 = inlined_call_operand.vmem [shape: f32[8,32], index: 0, kind: input, shape index: {}]
  %s1 = inlined_call_operand.vmem [shape: f32[128,32], index: 1, kind: input, shape index: {}]
  %s2 = inlined_call_operand.vmem [shape: f32[8,128], index: 2, kind: input, shape index: {}]
  %s3 = inlined_call_operand.hbm [shape: f32[8,128], index: 3, kind: output, shape index: {}]
  %s4 = sld [smem:[#allocation0]]
  $region30: #{tpu_custom_call.1} parent=0
    _
  %s6 = ssub.s32 1, %s4
  %s7 = scalar_select 0, %s6, %s4
  $region1: #{tpu_custom_call.1} parent=0
    #allocation3 [shape = 'u8[4096]{0}', space=vmem, size = 0x1000, scoped, tag = 'output window, operand 0, single buffered']
    #allocation4 [shape = 's32[1]{0}', space=sflag, size = 0x4, scoped, tag = 'scoped memory for tpu_custom_call.1']
    %8 = vsyncpa [#allocation4], 0
    // Predicated region
    $region2: #{tpu_custom_call.1} parent=1 // pred_check
      _
    $region3: #{tpu_custom_call.1} parent=1 // pred_check_branch
      %10 = sbr.rel (0) target = $region5
    $region4: #{tpu_custom_call.1} parent=1 // pred_region
      _
    $region5: #{tpu_custom_call.1} parent=1 // pred_fallthru
      _
    // Predicated region
    $region6: #{tpu_custom_call.1} parent=1 // pred_check
      _
    $region7: #{tpu_custom_call.1} parent=1 // pred_check_branch
      %12 = sbr.rel (0) target = $region9
    $region8: #{tpu_custom_call.1} parent=1 // pred_region
      _
    $region9: #{tpu_custom_call.1} parent=1 // pred_fallthru
      _
    // Predicated region
    $region10: #{tpu_custom_call.1} parent=1 // pred_check
      _
    $region11: #{tpu_custom_call.1} parent=1 // pred_check_branch
      %14 = sbr.rel (0) target = $region13
    $region12: #{tpu_custom_call.1} parent=1 // pred_region
      _
    $region13: #{tpu_custom_call.1} parent=1 // pred_fallthru
      _
    %p15 = scmp.eq.s32.totalorder 0, 0
    // Predicated region
    $region14: #{tpu_custom_call.1} parent=1 // pred_check
      %p16 = pneg %p15
    $region15: #{tpu_custom_call.1} parent=1 // pred_check_branch
      %18 = sbr.rel (%p16) target = $region17
    $region16: #{tpu_custom_call.1} parent=1 // pred_region
      %vm19 = vcmask 261120
      %20 = vst.msk [vmem:[#allocation2] sm:$0xff] %vm19, 0.0
    $region17: #{tpu_custom_call.1} parent=1 // pred_fallthru
      _
    %s21 = smul.u32 0, 128
    %s22 = scalar_lea.vmem %s1, %s21
    %v23 = vld [vmem:[%s22] sm:$0xff]
    %v24 = vld [vmem:[%s22 + $0x8] sm:$0xff]
    %v25 = vld [vmem:[%s22 + $0x10] sm:$0xff]
    %v26 = vld [vmem:[%s22 + $0x18] sm:$0xff]
    %v27 = vld [vmem:[%s22 + $0x20] sm:$0xff]
    %v28 = vld [vmem:[%s22 + $0x28] sm:$0xff]
    %v29 = vld [vmem:[%s22 + $0x30] sm:$0xff]
    %v30 = vld [vmem:[%s22 + $0x38] sm:$0xff]
    %v31 = vld [vmem:[%s22 + $0x40] sm:$0xff]
    %v32 = vld [vmem:[%s22 + $0x48] sm:$0xff]
    %v33 = vld [vmem:[%s22 + $0x50] sm:$0xff]
    %v34 = vld [vmem:[%s22 + $0x58] sm:$0xff]
    %v35 = vld [vmem:[%s22 + $0x60] sm:$0xff]
    %v36 = vld [vmem:[%s22 + $0x68] sm:$0xff]
    %v37 = vld [vmem:[%s22 + $0x70] sm:$0xff]
    %v38 = vld [vmem:[%s22 + $0x78] sm:$0xff]
    %v39 = vld [vmem:[%s2] sm:$0xff]
    %v40 = vld [vmem:[#allocation2] sm:$0xff]
    %41 = vmatprep.subr.mxu0 0.0
    %42 = vmatpush1.msra.mxu0 %v23
    %43 = vmatprep.subr.mxu0 0.0
    %44 = vmatpush1.msra.mxu0 %v24
    %45 = vmatprep.subr.mxu0 0.0
    %46 = vmatpush1.msra.mxu0 %v25
    %47 = vmatprep.subr.mxu0 0.0
    %48 = vmatpush1.msra.mxu0 %v26
    %49 = vmatprep.subr.mxu0 0.0
    %50 = vmatpush1.msra.mxu0 %v27
    %51 = vmatprep.subr.mxu0 0.0
    %52 = vmatpush1.msra.mxu0 %v28
    %53 = vmatprep.subr.mxu0 0.0
    %54 = vmatpush1.msra.mxu0 %v29
    %55 = vmatprep.subr.mxu0 0.0
    %56 = vmatpush1.msra.mxu0 %v30
    %57 = vmatprep.subr.mxu0 0.0
    %58 = vmatpush1.msra.mxu0 %v31
    %59 = vmatprep.subr.mxu0 0.0
    %60 = vmatpush1.msra.mxu0 %v32
    %61 = vmatprep.subr.mxu0 0.0
    %62 = vmatpush1.msra.mxu0 %v33
    %63 = vmatprep.subr.mxu0 0.0
    %64 = vmatpush1.msra.mxu0 %v34
    %65 = vmatprep.subr.mxu0 0.0
    %66 = vmatpush1.msra.mxu0 %v35
    %67 = vmatprep.subr.mxu0 0.0
    %68 = vmatpush1.msra.mxu0 %v36
    %69 = vmatprep.subr.mxu0 0.0
    %70 = vmatpush1.msra.mxu0 %v37
    %71 = vmatprep.subr.mxu0 0.0
    %72 = vmatpush1.msra.mxu0 %v38
    %73 = vmatprep.subr.mxu0 0.0
    %74 = vmatpush1.msra.mxu0 0.0
    %75 = vmatprep.subr.mxu0 0.0
    %76 = vmatpush1.msra.mxu0 0.0
    %77 = vmatprep.subr.mxu0 0.0
    %78 = vmatpush1.msra.mxu0 0.0
    %79 = vmatprep.subr.mxu0 0.0
    %80 = vmatpush1.msra.mxu0 0.0
    %81 = vmatprep.subr.mxu0 0.0
    %82 = vmatpush1.msra.mxu0 0.0
    %83 = vmatprep.subr.mxu0 0.0
    %84 = vmatpush1.msra.mxu0 0.0
    %85 = vmatprep.subr.mxu0 0.0
    %86 = vmatpush1.msra.mxu0 0.0
    %87 = vmatprep.subr.mxu0 0.0
    %88 = vmatpush1.msra.mxu0 0.0
    %89 = vmatprep.subr.mxu0 0.0
    %90 = vmatpush1.msra.mxu0 0.0
    %91 = vmatprep.subr.mxu0 0.0
    %92 = vmatpush1.msra.mxu0 0.0
    %93 = vmatprep.subr.mxu0 0.0
    %94 = vmatpush1.msra.mxu0 0.0
    %95 = vmatprep.subr.mxu0 0.0
    %96 = vmatpush1.msra.mxu0 0.0
    %97 = vmatprep.subr.mxu0 0.0
    %98 = vmatpush1.msra.mxu0 0.0
    %99 = vmatprep.subr.mxu0 0.0
    %100 = vmatpush1.msra.mxu0 0.0
    %101 = vmatprep.subr.mxu0 0.0
    %102 = vmatpush1.msra.mxu0 0.0
    %103 = vmatprep.subr.mxu0 0.0
    %104 = vmatpush1.msra.mxu0 0.0
    %105 = vmatprep.mubr.f32.mxu0 0.0
    %106 = vmatmul.mubr.f32.gmra.mrb[0].mxu0 %v39
    %v107 = vpop.f32.mrb[0].mxu0
    %v108 = vadd.f32 0.0, %v107
    %v109 = vpop.f32.mrb[0].mxu0
    %110 = vdwg.mxu0
    %v111 = vadd.f32 %v40, %v108
    %vm112 = vcmask 261120
    %113 = vst.msk [vmem:[#allocation2] sm:$0xff] %vm112, %v111
    // Predicated region
    $region18: #{tpu_custom_call.1} parent=1 // pred_check
      %p114 = pneg %p15
    $region19: #{tpu_custom_call.1} parent=1 // pred_check_branch
      %116 = sbr.rel (%p114) target = $region21
    $region20: #{tpu_custom_call.1} parent=1 // pred_region
      %v117 = vld [vmem:[%s0] sm:$0xff]
      %v118 = vld [vmem:[#allocation2] sm:$0xff]
      %v119 = vmul.f32 %v117, %v118
      %v120 = vsel %vm112, %v119, 0.0
      %121 = vadd.xlane.f32.xlu0 %v120
      %v122 = vpop.xlane.xlu0 %121
      %123 = vst [vmem:[#allocation3] sm:$0xff] %v122
    $region21: #{tpu_custom_call.1} parent=1 // pred_fallthru
      _
    // Predicated region
    $region22: #{tpu_custom_call.1} parent=1 // pred_check
      _
    $region23: #{tpu_custom_call.1} parent=1 // pred_check_branch
      %125 = sbr.rel (0) target = $region25
    $region24: #{tpu_custom_call.1} parent=1 // pred_region
      %s127 = ssub.s32 128, 128
      %128 = vsyncadd [#allocation4], %s127
      %s130 = sshll.u32 [#allocation3], 4
      %s131 = int_to_ptr.vmem [resolvable:$true] %s130
      %133 = dma.vmem_to_hbm [thread:$0]  %s131, 128, %s3, [#allocation4]
    $region25: #{tpu_custom_call.1} parent=1 // pred_fallthru
      _
    // Predicated region
    $region26: #{tpu_custom_call.1} parent=1 // pred_check
      _
    $region27: #{tpu_custom_call.1} parent=1 // pred_check_branch
      %135 = sbr.rel (0) target = $region29
    $region28: #{tpu_custom_call.1} parent=1 // pred_region
      %136 = dma.done [#allocation4], 128
    $region29: #{tpu_custom_call.1} parent=1 // pred_fallthru
      _
    %137 = vsyncpa [#allocation4], 1

</llo_original>
